<compile_context>
chip_gen: v6e
topology: v6e:2x2x1
jax: 0.10.0
libtpu: 0.0.40
codegen_flags: <defaults>
</compile_context>

<pallas_src>
import functools

import jax
import jax.numpy as jnp
from jax.experimental import pallas as pl
from jax.experimental.pallas import tpu as pltpu


def _round_up(x: int, m: int) -> int:
    return (x + m - 1) // m * m


def dqn_mlp_kernel(x_ref, w1_ref, b1_ref, w2_ref, b2_ref, w3_ref, b3_ref,
                   q_ref, act_ref, *, action_dim: int):
    """Fused 3-layer MLP forward for one batch tile (weights VMEM-resident)."""
    # Layer 1: Linear(S -> H1) + ReLU   (Dropout = identity in eval mode)
    # bias + ReLU + bf16 cast fused: only the bf16 h1 stays live downstream.
    x = x_ref[...].astype(jnp.bfloat16)
    h1 = jnp.maximum(
        jnp.dot(x, w1_ref[...], preferred_element_type=jnp.float32) + b1_ref[...],
        0.0).astype(jnp.bfloat16)

    # Layer 2: Linear(H1 -> H2) + ReLU  (Dropout = identity in eval mode)
    h2 = jnp.maximum(
        jnp.dot(h1, w2_ref[...], preferred_element_type=jnp.float32) + b2_ref[...],
        0.0).astype(jnp.bfloat16)

    # Output layer: Linear(H2 -> A_pad)  (lane-padded to 128; pads are zero)
    q = jnp.dot(h2, w3_ref[...], preferred_element_type=jnp.float32) + b3_ref[...]

    # Store q in bf16 -> halves HBM writeback; stays lane-dense / unmasked.
    q_out = q.astype(q_ref.dtype)
    q_ref[...] = q_out

    # Fused greedy action selection over the valid (un-padded) action lanes,
    # computed on the rounded values actually emitted so it matches q_ref.
    q_sel = q_out.astype(jnp.float32)
    lane = jax.lax.broadcasted_iota(jnp.int32, q_sel.shape, dimension=1)
    q_valid = jnp.where(lane < action_dim, q_sel, -jnp.inf)
    q_max = jnp.max(q_valid, axis=-1, keepdims=True)
    idx = jnp.where(q_valid == q_max, lane, q_sel.shape[-1])  # sentinel = A_pad
    # first-match argmax; clamp guards the all-NaN-row corner case.
    act = jnp.minimum(jnp.min(idx, axis=-1, keepdims=True), action_dim - 1)
    # Lane-dense store: transpose (TB, 1) -> (1, TB) (cheap XLU op) so the
    # action write is a full-width vst instead of a masked last-dim-1 store.
    act_ref[...] = act.astype(act_ref.dtype).T


def dqn_forward(state, params, action_dim, *, block_b: int = 512):
    """state: (B, state_dim) f32.

    Returns:
      q_pad:   (B_pad, A_pad) bf16  -- valid region is [:B, :action_dim]
               (returned padded so no extra HBM-roundtrip slice copy is made;
                index it at the consumer).
      actions: (B,) int32 greedy actions (argmax over valid action lanes).
    """
    w1, b1, w2, b2, w3, b3 = params
    B, S = state.shape
    H1 = w1.shape[1]
    H2 = w2.shape[1]
    A_pad = w3.shape[1]                     # already lane-padded to 128 mult

    # Batch tile: whole batch in one step for B <= block_b; otherwise block_b
    # (multiple of 8 sublanes). Keeps grid >= 2 for large B so both v7x TCs
    # get work via dimension_semantics=("parallel",).
    TB = min(_round_up(B, 8), block_b)
    B_pad = _round_up(B, TB)
    if B_pad != B:
        state = jnp.pad(state, ((0, B_pad - B), (0, 0)))
    num_tiles = B_pad // TB

    vmem = pltpu.MemorySpace.VMEM
    kernel = functools.partial(dqn_mlp_kernel, action_dim=action_dim)

    # Advisory cost estimate so XLA schedules/overlaps the custom call well.
    weight_bytes = sum(int(p.size) * p.dtype.itemsize for p in params)
    flops = 2 * B_pad * (S * H1 + H1 * H2 + H2 * A_pad)
    bytes_accessed = (B_pad * S * 4          # state read (f32)
                      + weight_bytes         # weights/biases (read once)
                      + B_pad * A_pad * 2    # q writeback (bf16)
                      + num_tiles * TB * 4)  # actions writeback (int32)
    cost = pl.CostEstimate(flops=flops, transcendentals=0,
                           bytes_accessed=bytes_accessed)

    # Only raise the scoped-VMEM limit if the (double-buffered) footprint
    # estimate would exceed the ~32 MiB default; stay under v7x's 64 MiB.
    est_vmem = (2 * weight_bytes                                   # resident, 2x buffered
                + 2 * (TB * S * 4 + TB * A_pad * 2 + TB * 4)       # x, q, act buffers
                + TB * (H1 + H2) * 6)                              # f32 + bf16 intermediates
    compiler_kwargs = dict(dimension_semantics=("parallel",))
    if est_vmem > 30 * 1024 * 1024:
        compiler_kwargs["vmem_limit_bytes"] = int(min(est_vmem * 12 // 10,
                                                      64 * 1024 * 1024))

    q_pad, act_tiles = pl.pallas_call(
        kernel,
        grid=(num_tiles,),
        out_shape=(
            jax.ShapeDtypeStruct((B_pad, A_pad), jnp.bfloat16),
            jax.ShapeDtypeStruct((num_tiles, TB), jnp.int32),
        ),
        in_specs=[
            # batch-tiled activations
            pl.BlockSpec((TB, S), lambda i: (i, 0), memory_space=vmem),
            # weights / biases: constant index_map -> DMA'd once, VMEM-resident
            pl.BlockSpec(w1.shape, lambda i: (0, 0), memory_space=vmem),
            pl.BlockSpec(b1.shape, lambda i: (0, 0), memory_space=vmem),
            pl.BlockSpec(w2.shape, lambda i: (0, 0), memory_space=vmem),
            pl.BlockSpec(b2.shape, lambda i: (0, 0), memory_space=vmem),
            pl.BlockSpec(w3.shape, lambda i: (0, 0), memory_space=vmem),
            pl.BlockSpec(b3.shape, lambda i: (0, 0), memory_space=vmem),
        ],
        out_specs=(
            pl.BlockSpec((TB, A_pad), lambda i: (i, 0), memory_space=vmem),
            pl.BlockSpec((1, TB), lambda i: (i, 0), memory_space=vmem),
        ),
        compiler_params=pltpu.CompilerParams(**compiler_kwargs),
        cost_estimate=cost,
    )(state, w1, b1, w2, b2, w3, b3)

    actions = act_tiles.reshape(-1)[:B]
    return q_pad, actions


def init_params(key, state_dim, action_dim, hidden_dims=(256, 128), *,
                lane_pad=128):
    """PyTorch nn.Linear-style init (uniform +/- 1/sqrt(fan_in)).
    Weights stored (in_dim, out_dim) in bf16; biases (1, out_dim) in f32.
    The output layer is zero-padded along out_dim to a multiple of 128 lanes."""
    dims = [state_dim, *hidden_dims, action_dim]
    params = []
    n_layers = len(dims) - 1
    for i in range(n_layers):
        fan_in, fan_out = dims[i], dims[i + 1]
        key, kw, kb = jax.random.split(key, 3)
        bound = 1.0 / (fan_in ** 0.5)
        w = jax.random.uniform(kw, (fan_in, fan_out), jnp.float32, -bound, bound)
        b = jax.random.uniform(kb, (1, fan_out), jnp.float32, -bound, bound)
        if i == n_layers - 1:                       # pad action dim to 128 lanes
            out_pad = _round_up(fan_out, lane_pad)
            w = jnp.pad(w, ((0, 0), (0, out_pad - fan_out)))
            b = jnp.pad(b, ((0, 0), (0, out_pad - fan_out)))
        params.extend([w.astype(jnp.bfloat16), b])  # bf16 weights, f32 biases
    return tuple(params)


def ref_forward(state, params, action_dim):
    """Pure-JAX reference with identical bf16-in / f32-accumulate semantics."""
    w1, b1, w2, b2, w3, b3 = params
    x = state.astype(jnp.bfloat16)
    h1 = jnp.maximum(jnp.dot(x, w1, preferred_element_type=jnp.float32) + b1, 0.0)
    h2 = jnp.maximum(
        jnp.dot(h1.astype(jnp.bfloat16), w2, preferred_element_type=jnp.float32) + b2, 0.0)
    q = jnp.dot(h2.astype(jnp.bfloat16), w3, preferred_element_type=jnp.float32) + b3
    return q[:, :action_dim]


if __name__ == "__main__":
    key = jax.random.PRNGKey(0)

    batch = 24
    state_dim = 32
    action_dim = 8
    hidden_dims = (256, 128)

    key, k_state = jax.random.split(key)
    state = jax.random.normal(k_state, (batch, state_dim), dtype=jnp.float32)
    params = init_params(key, state_dim, action_dim, hidden_dims)

    # Default call: the whole (small) batch runs as a single grid step.
    q_pad, actions = dqn_forward(state, params, action_dim)
    jax.block_until_ready((q_pad, actions))

    ref_q = ref_forward(state, params, action_dim)
    # Verification-only slice into the padded buffer (not part of the hot path).
    q_values = q_pad[:batch, :action_dim].astype(jnp.float32)
    assert q_pad.shape[1] % 128 == 0
    assert q_values.shape == (batch, action_dim)
    assert actions.shape == (batch,)
    # bf16 q output -> loosened tolerance vs the f32 reference.
    assert jnp.allclose(q_values, ref_q, atol=3e-2, rtol=3e-2), "q mismatch vs JAX reference"
    # Fused argmax must be consistent with the kernel's own emitted q-values.
    assert jnp.array_equal(
        actions, jnp.argmax(q_pad[:batch, :action_dim], axis=-1)), "argmax mismatch"

    # Also exercise the multi-step batch grid path (padding + lane-dense
    # per-tile action blocks) with a small tile.
    q_pad2, actions2 = dqn_forward(state, params, action_dim, block_b=16)
    jax.block_until_ready((q_pad2, actions2))
    assert jnp.allclose(q_pad2[:batch, :action_dim].astype(jnp.float32),
                        ref_q, atol=3e-2, rtol=3e-2), "q mismatch (multi-tile)"
    assert jnp.array_equal(actions2, actions), "action mismatch (multi-tile)"

    print("KERNEL_OK")
</pallas_src>

<mosaic_0001>
module attributes {stable_mosaic.version = 11 : i64} {
  func.func @dqn_mlp_kernel(%arg0: i32, %arg1: memref<24x32xf32, #tpu.memory_space<vmem>>, %arg2: memref<32x256xbf16, #tpu.memory_space<vmem>>, %arg3: memref<1x256xf32, #tpu.memory_space<vmem>>, %arg4: memref<256x128xbf16, #tpu.memory_space<vmem>>, %arg5: memref<1x128xf32, #tpu.memory_space<vmem>>, %arg6: memref<128x128xbf16, #tpu.memory_space<vmem>>, %arg7: memref<1x128xf32, #tpu.memory_space<vmem>>, %arg8: memref<24x128xbf16, #tpu.memory_space<vmem>>, %arg9: memref<1x24xi32, #tpu.memory_space<vmem>>) attributes {dimension_semantics = [#tpu.dimension_semantics<parallel>], iteration_bounds = array<i64: 1>, scalar_prefetch = 0 : i64, scratch_operands = 0 : i64, tpu.core_type = #tpu.core_type<tc>, window_params = [{transform_indices = @transform_0, window_bounds = array<i64: 24, 32>}, {pipeline_mode = #tpu.pipeline_mode<synchronous>, transform_indices = @transform_1, window_bounds = array<i64: 32, 256>}, {pipeline_mode = #tpu.pipeline_mode<synchronous>, transform_indices = @transform_2, window_bounds = array<i64: 1, 256>}, {pipeline_mode = #tpu.pipeline_mode<synchronous>, transform_indices = @transform_3, window_bounds = array<i64: 256, 128>}, {pipeline_mode = #tpu.pipeline_mode<synchronous>, transform_indices = @transform_4, window_bounds = array<i64: 1, 128>}, {pipeline_mode = #tpu.pipeline_mode<synchronous>, transform_indices = @transform_5, window_bounds = array<i64: 128, 128>}, {pipeline_mode = #tpu.pipeline_mode<synchronous>, transform_indices = @transform_6, window_bounds = array<i64: 1, 128>}, {transform_indices = @transform_7, window_bounds = array<i64: 24, 128>}, {transform_indices = @transform_8, window_bounds = array<i64: 1, 24>}]} {
    %c0 = arith.constant 0 : index
    %c0_0 = arith.constant 0 : index
    %0 = vector.load %arg1[%c0, %c0_0] : memref<24x32xf32, #tpu.memory_space<vmem>>, vector<24x32xf32>
    %1 = arith.truncf %0 : vector<24x32xf32> to vector<24x32xbf16>
    %c0_1 = arith.constant 0 : index
    %c0_2 = arith.constant 0 : index
    %2 = vector.load %arg2[%c0_1, %c0_2] : memref<32x256xbf16, #tpu.memory_space<vmem>>, vector<32x256xbf16>
    %cst = arith.constant dense<0.000000e+00> : vector<24x256xf32>
    %3 = tpu.matmul %1, %2, %cst {dimension_numbers = #tpu.dot_dimension_numbers<[1], [0], [0], [1], [0, 0, 1, 1], [], []>} : vector<24x32xbf16>, vector<32x256xbf16>, vector<24x256xf32> -> vector<24x256xf32>
    %c0_3 = arith.constant 0 : index
    %c0_4 = arith.constant 0 : index
    %4 = vector.load %arg3[%c0_3, %c0_4] : memref<1x256xf32, #tpu.memory_space<vmem>>, vector<1x256xf32>
    %5 = vector.broadcast %4 : vector<1x256xf32> to vector<24x256xf32>
    %6 = arith.addf %3, %5 : vector<24x256xf32>
    %cst_5 = arith.constant 0.000000e+00 : f32
    %7 = vector.broadcast %cst_5 : f32 to vector<24x256xf32>
    %8 = arith.maximumf %6, %7 : vector<24x256xf32>
    %9 = arith.truncf %8 : vector<24x256xf32> to vector<24x256xbf16>
    %c0_6 = arith.constant 0 : index
    %c0_7 = arith.constant 0 : index
    %10 = vector.load %arg4[%c0_6, %c0_7] : memref<256x128xbf16, #tpu.memory_space<vmem>>, vector<256x128xbf16>
    %cst_8 = arith.constant dense<0.000000e+00> : vector<24x128xf32>
    %11 = tpu.matmul %9, %10, %cst_8 {dimension_numbers = #tpu.dot_dimension_numbers<[1], [0], [0], [1], [0, 0, 1, 1], [], []>} : vector<24x256xbf16>, vector<256x128xbf16>, vector<24x128xf32> -> vector<24x128xf32>
    %c0_9 = arith.constant 0 : index
    %c0_10 = arith.constant 0 : index
    %12 = vector.load %arg5[%c0_9, %c0_10] : memref<1x128xf32, #tpu.memory_space<vmem>>, vector<1x128xf32>
    %13 = vector.broadcast %12 : vector<1x128xf32> to vector<24x128xf32>
    %14 = arith.addf %11, %13 : vector<24x128xf32>
    %cst_11 = arith.constant 0.000000e+00 : f32
    %15 = vector.broadcast %cst_11 : f32 to vector<24x128xf32>
    %16 = arith.maximumf %14, %15 : vector<24x128xf32>
    %17 = arith.truncf %16 : vector<24x128xf32> to vector<24x128xbf16>
    %c0_12 = arith.constant 0 : index
    %c0_13 = arith.constant 0 : index
    %18 = vector.load %arg6[%c0_12, %c0_13] : memref<128x128xbf16, #tpu.memory_space<vmem>>, vector<128x128xbf16>
    %cst_14 = arith.constant dense<0.000000e+00> : vector<24x128xf32>
    %19 = tpu.matmul %17, %18, %cst_14 {dimension_numbers = #tpu.dot_dimension_numbers<[1], [0], [0], [1], [0, 0, 1, 1], [], []>} : vector<24x128xbf16>, vector<128x128xbf16>, vector<24x128xf32> -> vector<24x128xf32>
    %c0_15 = arith.constant 0 : index
    %c0_16 = arith.constant 0 : index
    %20 = vector.load %arg7[%c0_15, %c0_16] : memref<1x128xf32, #tpu.memory_space<vmem>>, vector<1x128xf32>
    %21 = vector.broadcast %20 : vector<1x128xf32> to vector<24x128xf32>
    %22 = arith.addf %19, %21 : vector<24x128xf32>
    %23 = arith.truncf %22 : vector<24x128xf32> to vector<24x128xbf16>
    %c0_17 = arith.constant 0 : index
    %c0_18 = arith.constant 0 : index
    %24 = vector.load %arg8[%c0_17, %c0_18] : memref<24x128xbf16, #tpu.memory_space<vmem>>, vector<24x128xbf16>
    tpu.vector_store %arg8[%c0_17, %c0_18], %23 {strides = array<i32>} : memref<24x128xbf16, #tpu.memory_space<vmem>>, vector<24x128xbf16>,
    %25 = arith.extf %23 : vector<24x128xbf16> to vector<24x128xf32>
    %26 = tpu.iota {dimensions = array<i32: 1>} : vector<24x128xi32>
    %c8_i32 = arith.constant 8 : i32
    %27 = vector.broadcast %c8_i32 : i32 to vector<24x128xi32>
    %28 = arith.cmpi slt, %26, %27 : vector<24x128xi32>
    %cst_19 = arith.constant 0xFF800000 : f32
    %29 = vector.broadcast %cst_19 : f32 to vector<24x128xf32>
    %30 = arith.select %28, %25, %29 : vector<24x128xi1>, vector<24x128xf32>
    %cst_20 = arith.constant dense<0xFF800000> : vector<24xf32>
    %31 = vector.multi_reduction <maximumf>, %30, %cst_20 [1] : vector<24x128xf32> to vector<24xf32>
    %32 = vector.shape_cast %31 : vector<24xf32> to vector<24x1xf32>
    %33 = vector.broadcast %32 : vector<24x1xf32> to vector<24x128xf32>
    %34 = arith.cmpf oeq, %30, %33 : vector<24x128xf32>
    %c128_i32 = arith.constant 128 : i32
    %35 = vector.broadcast %c128_i32 : i32 to vector<24x128xi32>
    %36 = arith.select %34, %26, %35 : vector<24x128xi1>, vector<24x128xi32>
    %cst_21 = arith.constant dense<2147483647> : vector<24xi32>
    %37 = vector.multi_reduction <minsi>, %36, %cst_21 [1] : vector<24x128xi32> to vector<24xi32>
    %38 = vector.shape_cast %37 : vector<24xi32> to vector<24x1xi32>
    %c7_i32 = arith.constant 7 : i32
    %39 = vector.broadcast %c7_i32 : i32 to vector<24x1xi32>
    %40 = arith.minsi %38, %39 : vector<24x1xi32>
    %41 = tpu.transpose %40, [1, 0] : vector<24x1xi32> -> vector<1x24xi32>
    %c0_22 = arith.constant 0 : index
    %c0_23 = arith.constant 0 : index
    %42 = vector.load %arg9[%c0_22, %c0_23] : memref<1x24xi32, #tpu.memory_space<vmem>>, vector<1x24xi32>
    tpu.vector_store %arg9[%c0_22, %c0_23], %41 {strides = array<i32>} : memref<1x24xi32, #tpu.memory_space<vmem>>, vector<1x24xi32>,
    return
  }
  func.func @transform_0(%arg0: i32) -> (i32, i32) {
    %c0_i32 = arith.constant 0 : i32
    %c0_i32_0 = arith.constant 0 : i32
    return %arg0, %c0_i32 : i32, i32
  }
  func.func @transform_1(%arg0: i32) -> (i32, i32) {
    %c0_i32 = arith.constant 0 : i32
    %c0_i32_0 = arith.constant 0 : i32
    %c0_i32_1 = arith.constant 0 : i32
    return %c0_i32, %c0_i32_0 : i32, i32
  }
  func.func @transform_2(%arg0: i32) -> (i32, i32) {
    %c0_i32 = arith.constant 0 : i32
    %c0_i32_0 = arith.constant 0 : i32
    %c0_i32_1 = arith.constant 0 : i32
    return %c0_i32, %c0_i32_0 : i32, i32
  }
  func.func @transform_3(%arg0: i32) -> (i32, i32) {
    %c0_i32 = arith.constant 0 : i32
    %c0_i32_0 = arith.constant 0 : i32
    %c0_i32_1 = arith.constant 0 : i32
    return %c0_i32, %c0_i32_0 : i32, i32
  }
  func.func @transform_4(%arg0: i32) -> (i32, i32) {
    %c0_i32 = arith.constant 0 : i32
    %c0_i32_0 = arith.constant 0 : i32
    %c0_i32_1 = arith.constant 0 : i32
    return %c0_i32, %c0_i32_0 : i32, i32
  }
  func.func @transform_5(%arg0: i32) -> (i32, i32) {
    %c0_i32 = arith.constant 0 : i32
    %c0_i32_0 = arith.constant 0 : i32
    %c0_i32_1 = arith.constant 0 : i32
    return %c0_i32, %c0_i32_0 : i32, i32
  }
  func.func @transform_6(%arg0: i32) -> (i32, i32) {
    %c0_i32 = arith.constant 0 : i32
    %c0_i32_0 = arith.constant 0 : i32
    %c0_i32_1 = arith.constant 0 : i32
    return %c0_i32, %c0_i32_0 : i32, i32
  }
  func.func @transform_7(%arg0: i32) -> (i32, i32) {
    %c0_i32 = arith.constant 0 : i32
    %c0_i32_0 = arith.constant 0 : i32
    return %arg0, %c0_i32 : i32, i32
  }
  func.func @transform_8(%arg0: i32) -> (i32, i32) {
    %c0_i32 = arith.constant 0 : i32
    %c0_i32_0 = arith.constant 0 : i32
    return %arg0, %c0_i32 : i32, i32
  }
}

</mosaic_0001>

<llo_original>
// kernel: tpu_custom_call.1
$region0: #{tpu_custom_call.1}
  #allocation0 [shape = 'u32[]', space=smem, size = 0x4, offset = 0x4, fixed_abs, tag = 'smem constant byte address 0x4 - core index']
  #allocation1 [shape = 'u32[144,128]{1,0:T(1,128)}', space=vmem, size = 0x12000, scoped, tag = 'internal scratch']
  %s0 = inlined_call_operand.hbm [shape: f32[24,32], index: 0, kind: input, shape index: {}]
  %s1 = inlined_call_operand.hbm [shape: bf16[32,256], index: 1, kind: input, shape index: {}]
  %s2 = inlined_call_operand.vmem [shape: f32[1,256], index: 2, kind: input, shape index: {}]
  %s3 = inlined_call_operand.hbm [shape: bf16[256,128], index: 3, kind: input, shape index: {}]
  %s4 = inlined_call_operand.vmem [shape: f32[1,128], index: 4, kind: input, shape index: {}]
  %s5 = inlined_call_operand.hbm [shape: bf16[128,128], index: 5, kind: input, shape index: {}]
  %s6 = inlined_call_operand.vmem [shape: f32[1,128], index: 6, kind: input, shape index: {}]
  %s7 = inlined_call_operand.hbm [shape: bf16[24,128], index: 7, kind: output, shape index: {0}]
  %s8 = inlined_call_operand.hbm [shape: s32[1,24], index: 8, kind: output, shape index: {1}]
  %9 = xla_tuple %s7, %s8
  %s10 = sld [smem:[#allocation0]]
  $region62: #{tpu_custom_call.1} parent=0
    _
  %s12 = ssub.s32 1, %s10
  %s13 = scalar_select 0, %s12, %s10
  $region1: #{tpu_custom_call.1} parent=0
    #allocation2 [shape = 'u8[12288]{0}', space=vmem, size = 0x3000, scoped, tag = 'input window, operand 0, single buffered']
    #allocation3 [shape = 's32[1]{0}', space=sflag, size = 0x4, scoped, tag = 'scoped memory for tpu_custom_call.1']
    #allocation4 [shape = 's32[1]{0}', space=sflag, size = 0x4, scoped, tag = 'scoped memory for tpu_custom_call.1']
    #allocation5 [shape = 'u8[16384]{0}', space=vmem, size = 0x4000, scoped, tag = 'input window, operand 1, single buffered']
    #allocation6 [shape = 's32[1]{0}', space=sflag, size = 0x4, scoped, tag = 'scoped memory for tpu_custom_call.1']
    #allocation7 [shape = 'u8[65536]{0}', space=vmem, size = 0x10000, scoped, tag = 'input window, operand 3, single buffered']
    #allocation8 [shape = 'u8[32768]{0}', space=vmem, size = 0x8000, scoped, tag = 'input window, operand 5, single buffered']
    #allocation9 [shape = 's32[1]{0}', space=sflag, size = 0x4, scoped, tag = 'scoped memory for tpu_custom_call.1']
    #allocation10 [shape = 'u8[6144]{0}', space=vmem, size = 0x1800, scoped, tag = 'output window, operand 0, single buffered']
    #allocation11 [shape = 'u8[512]{0}', space=vmem, size = 0x400, scoped, tag = 'output window, operand 1, single buffered']
    #allocation12 [shape = 's32[1]{0}', space=sflag, size = 0x4, scoped, tag = 'scoped memory for tpu_custom_call.1']
    %14 = vsyncpa [#allocation3], 0
    %15 = vsyncpa [#allocation6], 0
    %16 = vsyncpa [#allocation9], 0
    %17 = vsyncpa [#allocation4], 0
    %18 = vsyncpa [#allocation12], 0
    // Predicated region
    $region2: #{tpu_custom_call.1} parent=1 // pred_check
      _
    $region3: #{tpu_custom_call.1} parent=1 // pred_check_branch
      %20 = sbr.rel (0) target = $region5
    $region4: #{tpu_custom_call.1} parent=1 // pred_region
      %s22 = ssub.s32 384, 384
      %23 = vsyncadd [#allocation3], %s22
      %s24 = sshll.u32 [#allocation2], 4
      %s25 = int_to_ptr.vmem [resolvable:$true] %s24
      %30 = dma.hbm_to_vmem [thread:$0]  %s0, 384, %s25, [#allocation3], 128, 128, 8
    $region5: #{tpu_custom_call.1} parent=1 // pred_fallthru
      _
    // Predicated region
    $region6: #{tpu_custom_call.1} parent=1 // pred_check
      _
    $region7: #{tpu_custom_call.1} parent=1 // pred_check_branch
      %32 = sbr.rel (0) target = $region9
    $region8: #{tpu_custom_call.1} parent=1 // pred_region
      %s34 = ssub.s32 512, 512
      %35 = vsyncadd [#allocation6], %s34
      %s36 = sshll.u32 [#allocation5], 4
      %s37 = int_to_ptr.vmem [resolvable:$true] %s36
      %42 = dma.hbm_to_vmem [thread:$0]  %s1, 512, %s37, [#allocation6], 128, 128, 8
    $region9: #{tpu_custom_call.1} parent=1 // pred_fallthru
      _
    // Predicated region
    $region10: #{tpu_custom_call.1} parent=1 // pred_check
      _
    $region11: #{tpu_custom_call.1} parent=1 // pred_check_branch
      %44 = sbr.rel (0) target = $region13
    $region12: #{tpu_custom_call.1} parent=1 // pred_region
      _
    $region13: #{tpu_custom_call.1} parent=1 // pred_fallthru
      _
    // Predicated region
    $region14: #{tpu_custom_call.1} parent=1 // pred_check
      _
    $region15: #{tpu_custom_call.1} parent=1 // pred_check_branch
      %46 = sbr.rel (0) target = $region17
    $region16: #{tpu_custom_call.1} parent=1 // pred_region
      %s48 = ssub.s32 2048, 2048
      %49 = vsyncadd [#allocation6], %s48
      %s50 = sshll.u32 [#allocation7], 4
      %s51 = int_to_ptr.vmem [resolvable:$true] %s50
      %56 = dma.hbm_to_vmem [thread:$0]  %s3, 2048, %s51, [#allocation6], 64, 64, 4
    $region17: #{tpu_custom_call.1} parent=1 // pred_fallthru
      _
    // Predicated region
    $region18: #{tpu_custom_call.1} parent=1 // pred_check
      _
    $region19: #{tpu_custom_call.1} parent=1 // pred_check_branch
      %58 = sbr.rel (0) target = $region21
    $region20: #{tpu_custom_call.1} parent=1 // pred_region
      _
    $region21: #{tpu_custom_call.1} parent=1 // pred_fallthru
      _
    // Predicated region
    $region22: #{tpu_custom_call.1} parent=1 // pred_check
      _
    $region23: #{tpu_custom_call.1} parent=1 // pred_check_branch
      %60 = sbr.rel (0) target = $region25
    $region24: #{tpu_custom_call.1} parent=1 // pred_region
      %s62 = ssub.s32 1024, 1024
      %63 = vsyncadd [#allocation9], %s62
      %s64 = sshll.u32 [#allocation8], 4
      %s65 = int_to_ptr.vmem [resolvable:$true] %s64
      %70 = dma.hbm_to_vmem [thread:$0]  %s5, 1024, %s65, [#allocation9], 64, 64, 4
    $region25: #{tpu_custom_call.1} parent=1 // pred_fallthru
      _
    // Predicated region
    $region26: #{tpu_custom_call.1} parent=1 // pred_check
      _
    $region27: #{tpu_custom_call.1} parent=1 // pred_check_branch
      %72 = sbr.rel (0) target = $region29
    $region28: #{tpu_custom_call.1} parent=1 // pred_region
      _
    $region29: #{tpu_custom_call.1} parent=1 // pred_fallthru
      _
    // Predicated region
    $region30: #{tpu_custom_call.1} parent=1 // pred_check
      _
    $region31: #{tpu_custom_call.1} parent=1 // pred_check_branch
      %74 = sbr.rel (0) target = $region33
    $region32: #{tpu_custom_call.1} parent=1 // pred_region
      %75 = dma.done [#allocation3], 384
    $region33: #{tpu_custom_call.1} parent=1 // pred_fallthru
      _
    // Predicated region
    $region34: #{tpu_custom_call.1} parent=1 // pred_check
      _
    $region35: #{tpu_custom_call.1} parent=1 // pred_check_branch
      %77 = sbr.rel (0) target = $region37
    $region36: #{tpu_custom_call.1} parent=1 // pred_region
      %78 = dma.done [#allocation6], 512
    $region37: #{tpu_custom_call.1} parent=1 // pred_fallthru
      _
    // Predicated region
    $region38: #{tpu_custom_call.1} parent=1 // pred_check
      _
    $region39: #{tpu_custom_call.1} parent=1 // pred_check_branch
      %80 = sbr.rel (0) target = $region41
    $region40: #{tpu_custom_call.1} parent=1 // pred_region
      %81 = dma.done [#allocation6], 2048
    $region41: #{tpu_custom_call.1} parent=1 // pred_fallthru
      _
    // Predicated region
    $region42: #{tpu_custom_call.1} parent=1 // pred_check
      _
    $region43: #{tpu_custom_call.1} parent=1 // pred_check_branch
      %83 = sbr.rel (0) target = $region45
    $region44: #{tpu_custom_call.1} parent=1 // pred_region
      %84 = dma.done [#allocation9], 1024
    $region45: #{tpu_custom_call.1} parent=1 // pred_fallthru
      _
    %v86 = vld [vmem:[#allocation2] sm:$0xff]
    %v87 = vld [vmem:[#allocation2 + $0x8] sm:$0xff]
    %v88 = vld [vmem:[#allocation2 + $0x10] sm:$0xff]
    %v89 = vpack.c.bf16 %v87, %v86
    %v90 = vpack.c.bf16 %v88, %v88
    %v91 = vld [vmem:[#allocation5] sm:$0xff]
    %v92 = vld [vmem:[#allocation5 + $0x8] sm:$0xff]
    %v93 = vld [vmem:[#allocation5 + $0x10] sm:$0xff]
    %v94 = vld [vmem:[#allocation5 + $0x18] sm:$0xff]
    %v95 = vld [vmem:[%s2] sm:$0x3]
    %v97 = vlaneseq
    %v98 = vshrl.u32 %v97, 7
    %v99 = vsub.s32 0, %v98
    %v100 = vrot.slane %v95, %v99
    %v101 = vlaneseq
    %v102 = vshrl.u32 %v101, 7
    %v103 = vsub.s32 1, %v102
    %v104 = vrot.slane %v95, %v103
    %v111 = vunpack.c.l.b16 %v91
    %v112 = vunpack.c.h.b16 %v91
    %v113 = vunpack.c.l.b16 %v92
    %v114 = vunpack.c.h.b16 %v92
    %v115 = vunpack.c.l.b16 %v93
    %v116 = vunpack.c.h.b16 %v93
    %v117 = vunpack.c.l.b16 %v94
    %v118 = vunpack.c.h.b16 %v94
    %v119 = vpack.c.b16 %v113, %v111
    %v120 = vpack.c.b16 %v114, %v112
    %v121 = vpack.c.b16 %v117, %v115
    %v122 = vpack.c.b16 %v118, %v116
    %vm127 = vcmask 261120
    %v129 = vsel %vm127, %v89, 0
    %v132 = vsel %vm127, %v90, 0
    %134 = vmatprep.subr.bf16.mxu0 0
    %135 = vmatpush1.bf16.msra.mxu0 0
    %136 = vmatprep.subr.bf16.mxu0 0
    %137 = vmatpush1.bf16.msra.mxu0 0
    %138 = vmatprep.subr.bf16.mxu0 0
    %139 = vmatpush1.bf16.msra.mxu0 0
    %140 = vmatprep.subr.bf16.mxu0 0
    %141 = vmatpush1.bf16.msra.mxu0 0
    %142 = vmatprep.subr.bf16.mxu0 0
    %143 = vmatpush1.bf16.msra.mxu0 0
    %144 = vmatprep.subr.bf16.mxu0 0
    %145 = vmatpush1.bf16.msra.mxu0 0
    %146 = vmatprep.subr.bf16.mxu0 %v122
    %147 = vmatpush1.bf16.msra.mxu0 %v121
    %148 = vmatprep.subr.bf16.mxu0 %v120
    %149 = vmatpush1.bf16.msra.mxu0 %v119
    %150 = vmatprep.subr.bf16.mxu0 0
    %151 = vmatpush2.bf16.msra.mxu0 0
    %152 = vmatprep.subr.bf16.mxu0 0
    %153 = vmatpush2.bf16.msra.mxu0 0
    %154 = vmatprep.subr.bf16.mxu0 0
    %155 = vmatpush2.bf16.msra.mxu0 0
    %156 = vmatprep.subr.bf16.mxu0 0
    %157 = vmatpush2.bf16.msra.mxu0 0
    %158 = vmatprep.subr.bf16.mxu0 0
    %159 = vmatpush2.bf16.msra.mxu0 0
    %160 = vmatprep.subr.bf16.mxu0 0
    %161 = vmatpush2.bf16.msra.mxu0 0
    %162 = vmatprep.subr.bf16.mxu0 0
    %163 = vmatpush2.bf16.msra.mxu0 0
    %164 = vmatprep.subr.bf16.mxu0 0
    %165 = vmatpush2.bf16.msra.mxu0 0
    %166 = vmatprep.mubr.bf16.mxu0 0
    %167 = vmatmul.mubr.bf16.gmra.mxu0 %v129
    %v168 = vpop.f32.mrf.mxu0
    %v169 = vadd.f32 %v100, %v168
    %v170 = vpop.f32.mrf.mxu0
    %v171 = vadd.f32 %v104, %v170
    %v172 = vpop.f32.mrf.mxu0
    %v173 = vadd.f32 %v100, %v172
    %v174 = vpop.f32.mrf.mxu0
    %v175 = vadd.f32 %v104, %v174
    %176 = vmatprep.mubr.bf16.mxu0 0
    %177 = vmatmul.mubr.bf16.gmra.mxu0 %v132
    %v178 = vpop.f32.mrf.mxu0
    %v179 = vadd.f32 %v100, %v178
    %v180 = vpop.f32.mrf.mxu0
    %v181 = vadd.f32 %v104, %v180
    %v182 = vpop.f32.mrf.mxu0
    %v183 = vpop.f32.mrf.mxu0
    %184 = vdwg.mxu0
    %v185 = vmax.f32 %v169, 0.0
    %v186 = vmax.f32 %v171, 0.0
    %v187 = vmax.f32 %v173, 0.0
    %v188 = vmax.f32 %v175, 0.0
    %v189 = vmax.f32 %v179, 0.0
    %v190 = vmax.f32 %v181, 0.0
    %v191 = vpack.c.bf16 %v187, %v185
    %v192 = vpack.c.bf16 %v188, %v186
    %v193 = vpack.c.bf16 %v189, %v189
    %v194 = vpack.c.bf16 %v190, %v190
    %v195 = vld [vmem:[#allocation7] sm:$0xf]
    %v196 = vld [vmem:[#allocation7 + $0x4] sm:$0xf]
    %v197 = vld [vmem:[#allocation7 + $0x8] sm:$0xf]
    %v198 = vld [vmem:[#allocation7 + $0xc] sm:$0xf]
    %v199 = vld [vmem:[#allocation7 + $0x10] sm:$0xf]
    %v200 = vld [vmem:[#allocation7 + $0x14] sm:$0xf]
    %v201 = vld [vmem:[#allocation7 + $0x18] sm:$0xf]
    %v202 = vld [vmem:[#allocation7 + $0x1c] sm:$0xf]
    %v203 = vld [vmem:[#allocation7 + $0x20] sm:$0xf]
    %v204 = vld [vmem:[#allocation7 + $0x24] sm:$0xf]
    %v205 = vld [vmem:[#allocation7 + $0x28] sm:$0xf]
    %v206 = vld [vmem:[#allocation7 + $0x2c] sm:$0xf]
    %v207 = vld [vmem:[#allocation7 + $0x30] sm:$0xf]
    %v208 = vld [vmem:[#allocation7 + $0x34] sm:$0xf]
    %v209 = vld [vmem:[#allocation7 + $0x38] sm:$0xf]
    %v210 = vld [vmem:[#allocation7 + $0x3c] sm:$0xf]
    %v211 = vld [vmem:[#allocation7 + $0x40] sm:$0xf]
    %v212 = vld [vmem:[#allocation7 + $0x44] sm:$0xf]
    %v213 = vld [vmem:[#allocation7 + $0x48] sm:$0xf]
    %v214 = vld [vmem:[#allocation7 + $0x4c] sm:$0xf]
    %v215 = vld [vmem:[#allocation7 + $0x50] sm:$0xf]
    %v216 = vld [vmem:[#allocation7 + $0x54] sm:$0xf]
    %v217 = vld [vmem:[#allocation7 + $0x58] sm:$0xf]
    %v218 = vld [vmem:[#allocation7 + $0x5c] sm:$0xf]
    %v219 = vld [vmem:[#allocation7 + $0x60] sm:$0xf]
    %v220 = vld [vmem:[#allocation7 + $0x64] sm:$0xf]
    %v221 = vld [vmem:[#allocation7 + $0x68] sm:$0xf]
    %v222 = vld [vmem:[#allocation7 + $0x6c] sm:$0xf]
    %v223 = vld [vmem:[#allocation7 + $0x70] sm:$0xf]
    %v224 = vld [vmem:[#allocation7 + $0x74] sm:$0xf]
    %v225 = vld [vmem:[#allocation7 + $0x78] sm:$0xf]
    %v226 = vld [vmem:[#allocation7 + $0x7c] sm:$0xf]
    %v227 = vld [vmem:[%s4] sm:$0x1]
    %v229 = vlaneseq
    %v230 = vshrl.u32 %v229, 7
    %v231 = vsub.s32 0, %v230
    %v232 = vrot.slane %v227, %v231
    %v266 = vunpack.c.l.b16 %v195
    %v267 = vunpack.c.l.b16 %v196
    %v268 = vunpack.c.l.b16 %v197
    %v269 = vunpack.c.l.b16 %v198
    %v270 = vunpack.c.l.b16 %v199
    %v271 = vunpack.c.l.b16 %v200
    %v272 = vunpack.c.l.b16 %v201
    %v273 = vunpack.c.l.b16 %v202
    %v274 = vunpack.c.l.b16 %v203
    %v275 = vunpack.c.l.b16 %v204
    %v276 = vunpack.c.l.b16 %v205
    %v277 = vunpack.c.l.b16 %v206
    %v278 = vunpack.c.l.b16 %v207
    %v279 = vunpack.c.l.b16 %v208
    %v280 = vunpack.c.l.b16 %v209
    %v281 = vunpack.c.l.b16 %v210
    %v282 = vunpack.c.l.b16 %v211
    %v283 = vunpack.c.l.b16 %v212
    %v284 = vunpack.c.l.b16 %v213
    %v285 = vunpack.c.l.b16 %v214
    %v286 = vunpack.c.l.b16 %v215
    %v287 = vunpack.c.l.b16 %v216
    %v288 = vunpack.c.l.b16 %v217
    %v289 = vunpack.c.l.b16 %v218
    %v290 = vunpack.c.l.b16 %v219
    %v291 = vunpack.c.l.b16 %v220
    %v292 = vunpack.c.l.b16 %v221
    %v293 = vunpack.c.l.b16 %v222
    %v294 = vunpack.c.l.b16 %v223
    %v295 = vunpack.c.l.b16 %v224
    %v296 = vunpack.c.l.b16 %v225
    %v297 = vunpack.c.l.b16 %v226
    %v298 = vpack.c.b16 %v267, %v266
    %v299 = vpack.c.b16 %v269, %v268
    %v300 = vpack.c.b16 %v271, %v270
    %v301 = vpack.c.b16 %v273, %v272
    %v302 = vpack.c.b16 %v275, %v274
    %v303 = vpack.c.b16 %v277, %v276
    %v304 = vpack.c.b16 %v279, %v278
    %v305 = vpack.c.b16 %v281, %v280
    %v306 = vpack.c.b16 %v283, %v282
    %v307 = vpack.c.b16 %v285, %v284
    %v308 = vpack.c.b16 %v287, %v286
    %v309 = vpack.c.b16 %v289, %v288
    %v310 = vpack.c.b16 %v291, %v290
    %v311 = vpack.c.b16 %v293, %v292
    %v312 = vpack.c.b16 %v295, %v294
    %v313 = vpack.c.b16 %v297, %v296
    %330 = vmatprep.subr.bf16.mxu0 0
    %331 = vmatpush1.bf16.msra.mxu0 %v305
    %332 = vmatprep.subr.bf16.mxu0 0
    %333 = vmatpush1.bf16.msra.mxu0 %v304
    %334 = vmatprep.subr.bf16.mxu0 0
    %335 = vmatpush1.bf16.msra.mxu0 %v303
    %336 = vmatprep.subr.bf16.mxu0 0
    %337 = vmatpush1.bf16.msra.mxu0 %v302
    %338 = vmatprep.subr.bf16.mxu0 0
    %339 = vmatpush1.bf16.msra.mxu0 %v301
    %340 = vmatprep.subr.bf16.mxu0 0
    %341 = vmatpush1.bf16.msra.mxu0 %v300
    %342 = vmatprep.subr.bf16.mxu0 0
    %343 = vmatpush1.bf16.msra.mxu0 %v299
    %344 = vmatprep.subr.bf16.mxu0 0
    %345 = vmatpush1.bf16.msra.mxu0 %v298
    %346 = vmatprep.subr.bf16.mxu0 0
    %347 = vmatpush2.bf16.msra.mxu0 %v313
    %348 = vmatprep.subr.bf16.mxu0 0
    %349 = vmatpush2.bf16.msra.mxu0 %v312
    %350 = vmatprep.subr.bf16.mxu0 0
    %351 = vmatpush2.bf16.msra.mxu0 %v311
    %352 = vmatprep.subr.bf16.mxu0 0
    %353 = vmatpush2.bf16.msra.mxu0 %v310
    %354 = vmatprep.subr.bf16.mxu0 0
    %355 = vmatpush2.bf16.msra.mxu0 %v309
    %356 = vmatprep.subr.bf16.mxu0 0
    %357 = vmatpush2.bf16.msra.mxu0 %v308
    %358 = vmatprep.subr.bf16.mxu0 0
    %359 = vmatpush2.bf16.msra.mxu0 %v307
    %360 = vmatprep.subr.bf16.mxu0 0
    %361 = vmatpush2.bf16.msra.mxu0 %v306
    %362 = vmatprep.mubr.bf16.mxu0 %v192
    %363 = vmatmul.mubr.bf16.gmra.mxu0 %v191
    %v364 = vpop.f32.mrf.mxu0
    %v365 = vadd.f32 %v232, %v364
    %v366 = vpop.f32.mrf.mxu0
    %v367 = vpop.f32.mrf.mxu0
    %v368 = vadd.f32 %v232, %v367
    %v369 = vpop.f32.mrf.mxu0
    %370 = vmatprep.mubr.bf16.mxu0 %v194
    %371 = vmatmul.mubr.bf16.gmra.mxu0 %v193
    %v372 = vpop.f32.mrf.mxu0
    %v373 = vadd.f32 %v232, %v372
    %v374 = vpop.f32.mrf.mxu0
    %v375 = vpop.f32.mrf.mxu0
    %v376 = vpop.f32.mrf.mxu0
    %377 = vdwg.mxu0
    %v378 = vmax.f32 %v365, 0.0
    %v379 = vmax.f32 %v368, 0.0
    %v380 = vmax.f32 %v373, 0.0
    %v381 = vpack.c.bf16 %v379, %v378
    %v382 = vpack.c.bf16 %v380, %v380
    %v383 = vld [vmem:[#allocation8] sm:$0xf]
    %v384 = vld [vmem:[#allocation8 + $0x4] sm:$0xf]
    %v385 = vld [vmem:[#allocation8 + $0x8] sm:$0xf]
    %v386 = vld [vmem:[#allocation8 + $0xc] sm:$0xf]
    %v387 = vld [vmem:[#allocation8 + $0x10] sm:$0xf]
    %v388 = vld [vmem:[#allocation8 + $0x14] sm:$0xf]
    %v389 = vld [vmem:[#allocation8 + $0x18] sm:$0xf]
    %v390 = vld [vmem:[#allocation8 + $0x1c] sm:$0xf]
    %v391 = vld [vmem:[#allocation8 + $0x20] sm:$0xf]
    %v392 = vld [vmem:[#allocation8 + $0x24] sm:$0xf]
    %v393 = vld [vmem:[#allocation8 + $0x28] sm:$0xf]
    %v394 = vld [vmem:[#allocation8 + $0x2c] sm:$0xf]
    %v395 = vld [vmem:[#allocation8 + $0x30] sm:$0xf]
    %v396 = vld [vmem:[#allocation8 + $0x34] sm:$0xf]
    %v397 = vld [vmem:[#allocation8 + $0x38] sm:$0xf]
    %v398 = vld [vmem:[#allocation8 + $0x3c] sm:$0xf]
    %v399 = vld [vmem:[%s6] sm:$0x1]
    %v401 = vlaneseq
    %v402 = vshrl.u32 %v401, 7
    %v403 = vsub.s32 0, %v402
    %v404 = vrot.slane %v399, %v403
    %v422 = vunpack.c.l.b16 %v383
    %v423 = vunpack.c.l.b16 %v384
    %v424 = vunpack.c.l.b16 %v385
    %v425 = vunpack.c.l.b16 %v386
    %v426 = vunpack.c.l.b16 %v387
    %v427 = vunpack.c.l.b16 %v388
    %v428 = vunpack.c.l.b16 %v389
    %v429 = vunpack.c.l.b16 %v390
    %v430 = vunpack.c.l.b16 %v391
    %v431 = vunpack.c.l.b16 %v392
    %v432 = vunpack.c.l.b16 %v393
    %v433 = vunpack.c.l.b16 %v394
    %v434 = vunpack.c.l.b16 %v395
    %v435 = vunpack.c.l.b16 %v396
    %v436 = vunpack.c.l.b16 %v397
    %v437 = vunpack.c.l.b16 %v398
    %v438 = vpack.c.b16 %v423, %v422
    %v439 = vpack.c.b16 %v425, %v424
    %v440 = vpack.c.b16 %v427, %v426
    %v441 = vpack.c.b16 %v429, %v428
    %v442 = vpack.c.b16 %v431, %v430
    %v443 = vpack.c.b16 %v433, %v432
    %v444 = vpack.c.b16 %v435, %v434
    %v445 = vpack.c.b16 %v437, %v436
    %454 = vmatprep.subr.bf16.mxu0 0
    %455 = vmatpush1.bf16.msra.mxu0 %v445
    %456 = vmatprep.subr.bf16.mxu0 0
    %457 = vmatpush1.bf16.msra.mxu0 %v444
    %458 = vmatprep.subr.bf16.mxu0 0
    %459 = vmatpush1.bf16.msra.mxu0 %v443
    %460 = vmatprep.subr.bf16.mxu0 0
    %461 = vmatpush1.bf16.msra.mxu0 %v442
    %462 = vmatprep.subr.bf16.mxu0 0
    %463 = vmatpush1.bf16.msra.mxu0 %v441
    %464 = vmatprep.subr.bf16.mxu0 0
    %465 = vmatpush1.bf16.msra.mxu0 %v440
    %466 = vmatprep.subr.bf16.mxu0 0
    %467 = vmatpush1.bf16.msra.mxu0 %v439
    %468 = vmatprep.subr.bf16.mxu0 0
    %469 = vmatpush1.bf16.msra.mxu0 %v438
    %470 = vmatprep.subr.bf16.mxu0 0
    %471 = vmatpush2.bf16.msra.mxu0 0
    %472 = vmatprep.subr.bf16.mxu0 0
    %473 = vmatpush2.bf16.msra.mxu0 0
    %474 = vmatprep.subr.bf16.mxu0 0
    %475 = vmatpush2.bf16.msra.mxu0 0
    %476 = vmatprep.subr.bf16.mxu0 0
    %477 = vmatpush2.bf16.msra.mxu0 0
    %478 = vmatprep.subr.bf16.mxu0 0
    %479 = vmatpush2.bf16.msra.mxu0 0
    %480 = vmatprep.subr.bf16.mxu0 0
    %481 = vmatpush2.bf16.msra.mxu0 0
    %482 = vmatprep.subr.bf16.mxu0 0
    %483 = vmatpush2.bf16.msra.mxu0 0
    %484 = vmatprep.subr.bf16.mxu0 0
    %485 = vmatpush2.bf16.msra.mxu0 0
    %486 = vmatprep.mubr.bf16.mxu0 0
    %487 = vmatmul.mubr.bf16.gmra.mxu0 %v381
    %v488 = vpop.f32.mrf.mxu0
    %v489 = vadd.f32 %v404, %v488
    %v490 = vpop.f32.mrf.mxu0
    %v491 = vpop.f32.mrf.mxu0
    %v492 = vadd.f32 %v404, %v491
    %v493 = vpop.f32.mrf.mxu0
    %494 = vmatprep.mubr.bf16.mxu0 0
    %495 = vmatmul.mubr.bf16.gmra.mxu0 %v382
    %v496 = vpop.f32.mrf.mxu0
    %v497 = vadd.f32 %v404, %v496
    %v498 = vpop.f32.mrf.mxu0
    %v499 = vpop.f32.mrf.mxu0
    %v500 = vpop.f32.mrf.mxu0
    %501 = vdwg.mxu0
    %v502 = vpack.c.bf16 %v492, %v489
    %v503 = vpack.c.bf16 %v497, %v497
    %v506 = vunpack.c.l.b16 %v502
    %v507 = vunpack.c.h.b16 %v502
    %v508 = vunpack.c.l.b16 %v503
    %v509 = vpack.c.b16 %v506, %v506
    %v510 = vpack.c.b16 %v507, %v507
    %v511 = vpack.c.b16 %v508, %v508
    %515 = vst [vmem:[#allocation10] sm:$0xf] %v509
    %516 = vst [vmem:[#allocation10 + $0x4] sm:$0xf] %v510
    %517 = vst [vmem:[#allocation10 + $0x8] sm:$0xf] %v511
    %v518 = vunpack.c.l.bf16 %v502
    %v519 = vunpack.c.h.bf16 %v502
    %v520 = vunpack.c.l.bf16 %v503
    %v521 = vlaneseq
    %v522 = vand.u32 %v521, 127
    %vm523 = vcmp.lt.s32.totalorder %v522, 8
    %v524 = vsel %vm523, %v518, -inf
    %v525 = vsel %vm523, %v519, -inf
    %v526 = vsel %vm523, %v520, -inf
    %527 = vmax.xlane.f32.xlu0 %v524
    %v528 = vpop.xlane.xlu0 %527
    %529 = vmax.xlane.f32.xlu0 %v525
    %v530 = vpop.xlane.xlu0 %529
    %531 = vmax.xlane.f32.xlu0 %v526
    %v532 = vpop.xlane.xlu0 %531
    %vm533 = vcmp.eq.f32.partialorder %v524, %v528
    %vm534 = vcmp.eq.f32.partialorder %v525, %v530
    %vm535 = vcmp.eq.f32.partialorder %v526, %v532
    %v536 = vsel %vm533, %v522, 128
    %v537 = vsel %vm534, %v522, 128
    %v538 = vsel %vm535, %v522, 128
    %v539 = vand.u32 %v536, 65535
    %v540 = vshra.s32 %v536, 16
    %v541 = vcvt.s32.f32 %v539
    %v542 = vcvt.s32.f32 %v540
    %543 = vmin.xlane.f32.xlu0 %v542
    %v544 = vpop.xlane.xlu0 %543
    %vm545 = vcmp.eq.f32.partialorder %v542, %v544
    %v546 = vsel %vm545, %v541, inf
    %547 = vmin.xlane.f32.xlu0 %v546
    %v548 = vpop.xlane.xlu0 %547
    %v549 = vcvt.f32.s32 %v548
    %v550 = vcvt.f32.s32 %v544
    %v551 = vshll.u32 %v550, 16
    %v552 = vadd.s32 %v551, %v549
    %v553 = vand.u32 %v537, 65535
    %v554 = vshra.s32 %v537, 16
    %v555 = vcvt.s32.f32 %v553
    %v556 = vcvt.s32.f32 %v554
    %557 = vmin.xlane.f32.xlu0 %v556
    %v558 = vpop.xlane.xlu0 %557
    %vm559 = vcmp.eq.f32.partialorder %v556, %v558
    %v560 = vsel %vm559, %v555, inf
    %561 = vmin.xlane.f32.xlu0 %v560
    %v562 = vpop.xlane.xlu0 %561
    %v563 = vcvt.f32.s32 %v562
    %v564 = vcvt.f32.s32 %v558
    %v565 = vshll.u32 %v564, 16
    %v566 = vadd.s32 %v565, %v563
    %v567 = vand.u32 %v538, 65535
    %v568 = vshra.s32 %v538, 16
    %v569 = vcvt.s32.f32 %v567
    %v570 = vcvt.s32.f32 %v568
    %571 = vmin.xlane.f32.xlu0 %v570
    %v572 = vpop.xlane.xlu0 %571
    %vm573 = vcmp.eq.f32.partialorder %v570, %v572
    %v574 = vsel %vm573, %v569, inf
    %575 = vmin.xlane.f32.xlu0 %v574
    %v576 = vpop.xlane.xlu0 %575
    %v577 = vcvt.f32.s32 %v576
    %v578 = vcvt.f32.s32 %v572
    %v579 = vshll.u32 %v578, 16
    %v580 = vadd.s32 %v579, %v577
    %vm581 = vcmp.lt.s32.totalorder %v552, 7
    %v582 = vsel %vm581, %v552, 7
    %vm583 = vcmp.lt.s32.totalorder %v566, 7
    %v584 = vsel %vm583, %v566, 7
    %vm585 = vcmp.lt.s32.totalorder %v580, 7
    %v586 = vsel %vm585, %v580, 7
    %587 = vxpose.xlu0.b32.start [1/16] %v582, 128
    %588 = vxpose.xlu0.b32.cont [2/16] %v584, 128
    %589 = vxpose.xlu0.b32.cont [3/16] %v586, 128
    %590 = vxpose.xlu0.b32.cont [4/16] 0, 128
    %591 = vxpose.xlu0.b32.cont [5/16] 0, 128
    %592 = vxpose.xlu0.b32.cont [6/16] 0, 128
    %593 = vxpose.xlu0.b32.cont [7/16] 0, 128
    %594 = vxpose.xlu0.b32.cont [8/16] 0, 128
    %595 = vxpose.xlu0.b32.cont [9/16] 0, 128
    %596 = vxpose.xlu0.b32.cont [10/16] 0, 128
    %597 = vxpose.xlu0.b32.cont [11/16] 0, 128
    %598 = vxpose.xlu0.b32.cont [12/16] 0, 128
    %599 = vxpose.xlu0.b32.cont [13/16] 0, 128
    %600 = vxpose.xlu0.b32.cont [14/16] 0, 128
    %601 = vxpose.xlu0.b32.cont [15/16] 0, 128
    %602 = vxpose.xlu0.b32.end [16/16] 0, 128
    %v603 = vpop.trf.xlu0
    %v604 = vpop.trf.xlu0
    %v605 = vpop.trf.xlu0
    %v606 = vpop.trf.xlu0
    %v607 = vpop.trf.xlu0
    %v608 = vpop.trf.xlu0
    %v609 = vpop.trf.xlu0
    %v610 = vpop.trf.xlu0
    %v611 = vpop.trf.xlu0
    %v612 = vpop.trf.xlu0
    %v613 = vpop.trf.xlu0
    %v614 = vpop.trf.xlu0
    %v615 = vpop.trf.xlu0
    %v616 = vpop.trf.xlu0
    %v617 = vpop.trf.xlu0
    %v618 = vpop.trf.xlu0
    %vm619 = vcmask 188416
    %620 = vst.msk [vmem:[#allocation11] sm:$0x1] %vm619, %v603
    // Predicated region
    $region46: #{tpu_custom_call.1} parent=1 // pred_check
      _
    $region47: #{tpu_custom_call.1} parent=1 // pred_check_branch
      %622 = sbr.rel (0) target = $region49
    $region48: #{tpu_custom_call.1} parent=1 // pred_region
      %s624 = ssub.s32 192, 192
      %625 = vsyncadd [#allocation4], %s624
      %s626 = sshll.u32 [#allocation10], 4
      %s627 = int_to_ptr.vmem [resolvable:$true] %s626
      %632 = dma.vmem_to_hbm [thread:$0]  %s627, 192, %s7, [#allocation4], 64, 64, 4
    $region49: #{tpu_custom_call.1} parent=1 // pred_fallthru
      _
    // Predicated region
    $region50: #{tpu_custom_call.1} parent=1 // pred_check
      _
    $region51: #{tpu_custom_call.1} parent=1 // pred_check_branch
      %634 = sbr.rel (0) target = $region53
    $region52: #{tpu_custom_call.1} parent=1 // pred_region
      %s636 = ssub.s32 16, 16
      %637 = vsyncadd [#allocation12], %s636
      %s639 = sshll.u32 [#allocation11], 4
      %s640 = int_to_ptr.vmem [resolvable:$true] %s639
      %642 = dma.vmem_to_hbm [thread:$0]  %s640, 16, %s8, [#allocation12]
    $region53: #{tpu_custom_call.1} parent=1 // pred_fallthru
      _
    // Predicated region
    $region54: #{tpu_custom_call.1} parent=1 // pred_check
      _
    $region55: #{tpu_custom_call.1} parent=1 // pred_check_branch
      %644 = sbr.rel (0) target = $region57
    $region56: #{tpu_custom_call.1} parent=1 // pred_region
      %645 = dma.done [#allocation4], 192
    $region57: #{tpu_custom_call.1} parent=1 // pred_fallthru
      _
    // Predicated region
    $region58: #{tpu_custom_call.1} parent=1 // pred_check
      _
    $region59: #{tpu_custom_call.1} parent=1 // pred_check_branch
      %647 = sbr.rel (0) target = $region61
    $region60: #{tpu_custom_call.1} parent=1 // pred_region
      %648 = dma.done [#allocation12], 16
    $region61: #{tpu_custom_call.1} parent=1 // pred_fallthru
      _
    %649 = vsyncpa [#allocation3], 1
    %650 = vsyncpa [#allocation6], 1
    %651 = vsyncpa [#allocation9], 1
    %652 = vsyncpa [#allocation4], 1
    %653 = vsyncpa [#allocation12], 1

</llo_original>
